<compile_context>
chip_gen: v6e
topology: v6e:2x2x1
jax: 0.10.0
libtpu: 0.0.40
codegen_flags: <defaults>
</compile_context>

<pallas_src>
import functools

import jax
import jax.numpy as jnp
from jax import lax
from jax.experimental import pallas as pl
from jax.experimental.pallas import tpu as pltpu

LANE = 128
SUBLANES = 8
NUM_CORE_SPLITS = 2  # leading "parallel" grid axis (2 TCs on v7x; free elsewhere)


def _focal_weight(absd, gamma):
    """(1 + |d|)^gamma; small integer gammas stay on the VALU (no exp/log)."""
    base = 1.0 + absd
    g = float(gamma)
    if g == round(g) and 0.0 <= g <= 8.0:
        gi = int(round(g))
        if gi == 0:
            return jnp.ones_like(base)
        w = base
        for _ in range(gi - 1):
            w = w * base
        return w
    return base ** jnp.float32(g)


def _focal_mse_kernel(x_ref, y_ref, out_ref, *, gamma, tile_rows,
                      steps_per_core, num_tiles, rows_data, last_lanes,
                      needs_elem_mask, needs_block_gate):
    c = pl.program_id(0)   # core-split axis ("parallel")
    j = pl.program_id(1)   # reduction steps within this core ("arbitrary")

    # Each core-split owns its own resident output block; init on first step.
    @pl.when(j == 0)
    def _init():
        out_ref[...] = jnp.zeros_like(out_ref)

    def _accumulate():
        x = x_ref[...].astype(jnp.float32)
        y = y_ref[...].astype(jnp.float32)
        d = x - y

        if needs_elem_mask:
            # Global validity mask for ragged tails (partial last row tile
            # and/or partial last lane row). Uses select (not multiply) so any
            # garbage in the padded boundary block cannot leak NaNs.
            linear = c * steps_per_core + j
            tile = jnp.minimum(linear, num_tiles - 1)
            row0 = tile * tile_rows
            grow = row0 + lax.broadcasted_iota(jnp.int32, d.shape, 0)
            col = lax.broadcasted_iota(jnp.int32, d.shape, 1)
            valid = (grow < rows_data - 1) | (
                (grow == rows_data - 1) & (col < last_lanes))
            d = jnp.where(valid, d, 0.0)
            w = jnp.where(valid, _focal_weight(jnp.abs(d), gamma), 0.0)
        else:
            w = _focal_weight(jnp.abs(d), gamma)

        sq = d * d
        # Fold (tile_rows, 128) -> (tile_rows//8, 8, 128) and add along the
        # leading axis: pure VALU adds into the (8,128) vector accumulators,
        # no XLU reduce and no scalar read-modify-write chain per step.
        sq_p = jnp.sum(sq.reshape(-1, SUBLANES, LANE), axis=0)
        w_p = jnp.sum(w.reshape(-1, SUBLANES, LANE), axis=0)
        out_ref[0, 0, :, :] += sq_p
        out_ref[0, 1, :, :] += w_p

    if needs_block_gate:
        # When the number of row tiles does not split evenly across the core
        # axis, the clamped index_map re-fetches the last tile; skip the
        # duplicate contribution.
        @pl.when(c * steps_per_core + j < num_tiles)
        def _():
            _accumulate()
    else:
        _accumulate()


def focal_mse_loss(inputs, targets, gamma=2.0, *, tile_rows=1024):
    """Pallas implementation of FocalMSELoss.forward (returns a scalar f32)."""
    assert inputs.shape == targets.shape
    n_elem = int(inputs.size)

    # Flatten (free, contiguous reshape) — no dtype cast here; upcast in-kernel.
    x = inputs.reshape(-1)
    y = targets.reshape(-1)

    # Only pad (a copy) if numel is not a multiple of the lane width; padded
    # elements are excluded by the in-kernel mask.
    lane_pad = (-n_elem) % LANE
    if lane_pad:
        x = jnp.pad(x, (0, lane_pad))
        y = jnp.pad(y, (0, lane_pad))
    rows_data = (n_elem + lane_pad) // LANE
    x2 = x.reshape(rows_data, LANE)
    y2 = y.reshape(rows_data, LANE)

    # Effective row tile: multiple of 8 sublanes, no larger than the data.
    rows_rounded = ((rows_data + SUBLANES - 1) // SUBLANES) * SUBLANES
    tile_rows_eff = min(int(tile_rows), rows_rounded)
    tile_rows_eff = max(SUBLANES, (tile_rows_eff // SUBLANES) * SUBLANES)

    num_tiles = int(pl.cdiv(rows_data, tile_rows_eff))
    steps_per_core = int(pl.cdiv(num_tiles, NUM_CORE_SPLITS))

    last_lanes = n_elem - (rows_data - 1) * LANE
    needs_elem_mask = (rows_data % tile_rows_eff != 0) or (last_lanes != LANE)
    needs_block_gate = (NUM_CORE_SPLITS * steps_per_core) != num_tiles

    def in_index_map(c, j):
        # Clamp so the (possibly) out-of-range trailing step re-reads the last
        # valid tile; its contribution is gated off in the kernel.
        return (jnp.minimum(c * steps_per_core + j, num_tiles - 1), 0)

    kernel = functools.partial(
        _focal_mse_kernel,
        gamma=float(gamma),
        tile_rows=tile_rows_eff,
        steps_per_core=steps_per_core,
        num_tiles=num_tiles,
        rows_data=rows_data,
        last_lanes=int(last_lanes),
        needs_elem_mask=bool(needs_elem_mask),
        needs_block_gate=bool(needs_block_gate),
    )

    partial_sums = pl.pallas_call(
        kernel,
        out_shape=jax.ShapeDtypeStruct(
            (NUM_CORE_SPLITS, 2, SUBLANES, LANE), jnp.float32),
        grid_spec=pltpu.PrefetchScalarGridSpec(
            num_scalar_prefetch=0,
            grid=(NUM_CORE_SPLITS, steps_per_core),
            in_specs=[
                pl.BlockSpec((tile_rows_eff, LANE), in_index_map),
                pl.BlockSpec((tile_rows_eff, LANE), in_index_map),
            ],
            out_specs=pl.BlockSpec(
                (1, 2, SUBLANES, LANE), lambda c, j: (c, 0, 0, 0)),
        ),
        compiler_params=pltpu.CompilerParams(
            dimension_semantics=("parallel", "arbitrary"),
        ),
    )(x2, y2)

    # Final tiny reduction (2 cores x 2 stats x 8 x 128 floats) on the host.
    sq_sum = jnp.sum(partial_sums[:, 0], dtype=jnp.float32)
    w_sum = jnp.sum(partial_sums[:, 1], dtype=jnp.float32)

    n = jnp.float32(n_elem)
    mse = sq_sum / n
    mean_w = w_sum / n
    return mse * mean_w


if __name__ == "__main__":
    key = jax.random.PRNGKey(0)
    k1, k2 = jax.random.split(key)

    # Small NCHW-like shapes, consistent with a dense regression target.
    inputs = jax.random.normal(k1, (2, 4, 16, 16), dtype=jnp.float32)
    targets = jax.random.normal(k2, (2, 4, 16, 16), dtype=jnp.float32)

    loss = focal_mse_loss(inputs, targets, gamma=2.0)
    jax.block_until_ready(loss)

    # Reference check in plain JAX (same math as the PyTorch module).
    d = inputs - targets
    ref = jnp.mean(d * d) * jnp.mean((1.0 + jnp.abs(d)) ** 2.0)
    assert jnp.allclose(loss, ref, rtol=1e-5, atol=1e-6), (loss, ref)

    print("KERNEL_OK")
</pallas_src>

<mosaic_0001>
module attributes {stable_mosaic.version = 11 : i64} {
  func.func @_focal_mse_kernel(%arg0: i32, %arg1: i32, %arg2: memref<16x128xf32, #tpu.memory_space<vmem>>, %arg3: memref<16x128xf32, #tpu.memory_space<vmem>>, %arg4: memref<1x2x8x128xf32, #tpu.memory_space<vmem>>) attributes {dimension_semantics = [#tpu.dimension_semantics<parallel>, #tpu.dimension_semantics<arbitrary>], iteration_bounds = array<i64: 2, 1>, scalar_prefetch = 0 : i64, scratch_operands = 0 : i64, tpu.core_type = #tpu.core_type<tc>, window_params = [{transform_indices = @transform_0, window_bounds = array<i64: 16, 128>}, {transform_indices = @transform_1, window_bounds = array<i64: 16, 128>}, {transform_indices = @transform_2, window_bounds = array<i64: 1, 2, 8, 128>}]} {
    %c0_i32 = arith.constant 0 : i32
    %0 = arith.cmpi eq, %arg1, %c0_i32 : i32
    %1 = arith.extui %0 : i1 to i32
    %c0_i32_0 = arith.constant 0 : i32
    %2 = arith.cmpi ne, %1, %c0_i32_0 : i32
    scf.if %2 {
      %cst = arith.constant 0.000000e+00 : f32
      %8 = vector.broadcast %cst : f32 to vector<1x2x8x128xf32>
      %c0 = arith.constant 0 : index
      %c0_3 = arith.constant 0 : index
      %c0_4 = arith.constant 0 : index
      %c0_5 = arith.constant 0 : index
      %9 = vector.load %arg4[%c0, %c0_3, %c0_4, %c0_5] : memref<1x2x8x128xf32, #tpu.memory_space<vmem>>, vector<1x2x8x128xf32>
      tpu.vector_store %arg4[%c0, %c0_3, %c0_4, %c0_5], %8 {strides = array<i32>} : memref<1x2x8x128xf32, #tpu.memory_space<vmem>>, vector<1x2x8x128xf32>,
    } else {
    }
    %c1_i32 = arith.constant 1 : i32
    %3 = arith.muli %arg0, %c1_i32 : i32
    %4 = arith.addi %3, %arg1 : i32
    %c1_i32_1 = arith.constant 1 : i32
    %5 = arith.cmpi slt, %4, %c1_i32_1 : i32
    %6 = arith.extui %5 : i1 to i32
    %c0_i32_2 = arith.constant 0 : i32
    %7 = arith.cmpi ne, %6, %c0_i32_2 : i32
    scf.if %7 {
      %c0 = arith.constant 0 : index
      %c0_3 = arith.constant 0 : index
      %8 = vector.load %arg2[%c0, %c0_3] : memref<16x128xf32, #tpu.memory_space<vmem>>, vector<16x128xf32>
      %c0_4 = arith.constant 0 : index
      %c0_5 = arith.constant 0 : index
      %9 = vector.load %arg3[%c0_4, %c0_5] : memref<16x128xf32, #tpu.memory_space<vmem>>, vector<16x128xf32>
      %10 = arith.subf %8, %9 : vector<16x128xf32>
      %11 = math.absf %10 : vector<16x128xf32>
      %cst = arith.constant 1.000000e+00 : f32
      %12 = vector.broadcast %cst : f32 to vector<16x128xf32>
      %13 = arith.addf %12, %11 : vector<16x128xf32>
      %14 = arith.mulf %13, %13 : vector<16x128xf32>
      %15 = arith.mulf %10, %10 : vector<16x128xf32>
      %16 = vector.shape_cast %15 : vector<16x128xf32> to vector<2x8x128xf32>
      %cst_6 = arith.constant dense<0.000000e+00> : vector<8x128xf32>
      %17 = vector.multi_reduction <add>, %16, %cst_6 [0] : vector<2x8x128xf32> to vector<8x128xf32>
      %18 = vector.shape_cast %14 : vector<16x128xf32> to vector<2x8x128xf32>
      %cst_7 = arith.constant dense<0.000000e+00> : vector<8x128xf32>
      %19 = vector.multi_reduction <add>, %18, %cst_7 [0] : vector<2x8x128xf32> to vector<8x128xf32>
      %c0_8 = arith.constant 0 : index
      %c0_9 = arith.constant 0 : index
      %c0_10 = arith.constant 0 : index
      %c0_11 = arith.constant 0 : index
      %20 = vector.load %arg4[%c0_8, %c0_9, %c0_10, %c0_11] : memref<1x2x8x128xf32, #tpu.memory_space<vmem>>, vector<1x1x8x128xf32>
      %21 = vector.shape_cast %20 : vector<1x1x8x128xf32> to vector<8x128xf32>
      %22 = arith.addf %21, %17 : vector<8x128xf32>
      %c0_12 = arith.constant 0 : index
      %c0_13 = arith.constant 0 : index
      %c0_14 = arith.constant 0 : index
      %c0_15 = arith.constant 0 : index
      %23 = vector.load %arg4[%c0_12, %c0_13, %c0_14, %c0_15] : memref<1x2x8x128xf32, #tpu.memory_space<vmem>>, vector<1x1x8x128xf32>
      %24 = vector.shape_cast %23 : vector<1x1x8x128xf32> to vector<8x128xf32>
      %25 = vector.shape_cast %22 : vector<8x128xf32> to vector<1x1x8x128xf32>
      tpu.vector_store %arg4[%c0_12, %c0_13, %c0_14, %c0_15], %25 {strides = array<i32>} : memref<1x2x8x128xf32, #tpu.memory_space<vmem>>, vector<1x1x8x128xf32>,
      %c0_16 = arith.constant 0 : index
      %c1 = arith.constant 1 : index
      %c0_17 = arith.constant 0 : index
      %c0_18 = arith.constant 0 : index
      %26 = vector.load %arg4[%c0_16, %c1, %c0_17, %c0_18] : memref<1x2x8x128xf32, #tpu.memory_space<vmem>>, vector<1x1x8x128xf32>
      %27 = vector.shape_cast %26 : vector<1x1x8x128xf32> to vector<8x128xf32>
      %28 = arith.addf %27, %19 : vector<8x128xf32>
      %c0_19 = arith.constant 0 : index
      %c1_20 = arith.constant 1 : index
      %c0_21 = arith.constant 0 : index
      %c0_22 = arith.constant 0 : index
      %29 = vector.load %arg4[%c0_19, %c1_20, %c0_21, %c0_22] : memref<1x2x8x128xf32, #tpu.memory_space<vmem>>, vector<1x1x8x128xf32>
      %30 = vector.shape_cast %29 : vector<1x1x8x128xf32> to vector<8x128xf32>
      %31 = vector.shape_cast %28 : vector<8x128xf32> to vector<1x1x8x128xf32>
      tpu.vector_store %arg4[%c0_19, %c1_20, %c0_21, %c0_22], %31 {strides = array<i32>} : memref<1x2x8x128xf32, #tpu.memory_space<vmem>>, vector<1x1x8x128xf32>,
    } else {
    }
    return
  }
  func.func @transform_0(%arg0: i32, %arg1: i32) -> (i32, i32) {
    %c1_i32 = arith.constant 1 : i32
    %0 = arith.muli %arg0, %c1_i32 : i32
    %1 = arith.addi %0, %arg1 : i32
    %c0_i32 = arith.constant 0 : i32
    %2 = arith.minsi %1, %c0_i32 : i32
    %c0_i32_0 = arith.constant 0 : i32
    %c0_i32_1 = arith.constant 0 : i32
    return %2, %c0_i32_0 : i32, i32
  }
  func.func @transform_1(%arg0: i32, %arg1: i32) -> (i32, i32) {
    %c1_i32 = arith.constant 1 : i32
    %0 = arith.muli %arg0, %c1_i32 : i32
    %1 = arith.addi %0, %arg1 : i32
    %c0_i32 = arith.constant 0 : i32
    %2 = arith.minsi %1, %c0_i32 : i32
    %c0_i32_0 = arith.constant 0 : i32
    %c0_i32_1 = arith.constant 0 : i32
    return %2, %c0_i32_0 : i32, i32
  }
  func.func @transform_2(%arg0: i32, %arg1: i32) -> (i32, i32, i32, i32) {
    %c0_i32 = arith.constant 0 : i32
    %c0_i32_0 = arith.constant 0 : i32
    %c0_i32_1 = arith.constant 0 : i32
    %c0_i32_2 = arith.constant 0 : i32
    return %arg0, %c0_i32, %c0_i32_0, %c0_i32_1 : i32, i32, i32, i32
  }
}

</mosaic_0001>

<llo_original>
// kernel: tpu_custom_call.1
$region0: #{tpu_custom_call.1}
  #allocation0 [shape = 'u32[]', space=smem, size = 0x4, offset = 0x4, fixed_abs, tag = 'smem constant byte address 0x4 - core index']
  #allocation1 [shape = 'u32[144,128]{1,0:T(1,128)}', space=vmem, size = 0x12000, scoped, tag = 'internal scratch']
  %s0 = inlined_call_operand.hbm [shape: f32[16,128], index: 0, kind: input, shape index: {}]
  %s1 = inlined_call_operand.hbm [shape: f32[16,128], index: 1, kind: input, shape index: {}]
  %s2 = inlined_call_operand.hbm [shape: f32[2,2,8,128], index: 2, kind: output, shape index: {}]
  %s3 = sld [smem:[#allocation0]]
  $region57: #{tpu_custom_call.1} parent=0
    _
  %s5 = ssub.s32 1, %s3
  %s6 = scalar_select 0, %s5, %s3
  $region1: #{tpu_custom_call.1} parent=0
    #allocation2 [shape = 'u8[16384]{0}', space=vmem, size = 0x4000, scoped, tag = 'input window, operand 0']
    #allocation3 [shape = 's32[2]{0}', space=sflag, size = 0x8, scoped, tag = 'scoped memory for tpu_custom_call.1']
    #allocation4 [shape = 's32[2]{0}', space=sflag, size = 0x8, scoped, tag = 'scoped memory for tpu_custom_call.1']
    #allocation5 [shape = 'u8[16384]{0}', space=vmem, size = 0x4000, scoped, tag = 'input window, operand 1']
    #allocation6 [shape = 's32[2]{0}', space=sflag, size = 0x8, scoped, tag = 'scoped memory for tpu_custom_call.1']
    #allocation7 [shape = 'u8[16384]{0}', space=vmem, size = 0x4000, scoped, tag = 'output window, operand 0']
    %7 = vsyncpa [#allocation3], 0
    %s8 = scalar_lea.sflag [#allocation3], 1
    %9 = vsyncpa %s8, 0
    %10 = vsyncpa [#allocation6], 0
    %s11 = scalar_lea.sflag [#allocation6], 1
    %12 = vsyncpa %s11, 0
    %13 = vsyncpa [#allocation4], 0
    %s14 = scalar_lea.sflag [#allocation4], 1
    %15 = vsyncpa %s14, 0
    loop: start=0, step=1, limit=4
    $region2: #{tpu_custom_call.1} parent=1 // loop_pre_header
      _
    $region3: #{tpu_custom_call.1} parent=1 // loop_header
      %s17 = sphi 0, %s21
      %p18 = scmp.ge.s32.totalorder %s17, 4
      %s24 = sphi 0, %s36
      %s25 = sphi 0, %s32
      %s26 = sphi 0, %s24
      %s27 = sphi 0, %s25
      %s28 = sphi 0, %s26
      %s29 = sphi 0, %s27
      %s45 = sphi 0, %s47
      %s48 = sphi 0, %s45
      %s49 = sphi 0, %s48
      %s65 = sphi 0, %s49
      %s77 = sphi 0, %s79
      %s80 = sphi 0, %s77
      %s81 = sphi 0, %s80
      %s97 = sphi 0, %s81
      %s103 = sphi 0, %s105
      %s106 = sphi 0, %s103
      %s107 = sphi 0, %s106
      %s123 = sphi 0, %s107
    $region4: #{tpu_custom_call.1} parent=1 // loop_header_branch
      %20 = sbr.rel (%p18) target = $region8
    $region5: #{tpu_custom_call.1} parent=1 // loop_body
      %s22 = ssub.s32 %s17, 1
      %s23 = ssub.s32 %s17, 2
      %s30 = sadd.s32 1, %s25
      %p31 = scmp.ge.s32.totalorder %s30, 1
      %s32 = scalar_select %p31, 0, %s30
      %s33 = sadd.s32 1, %s24
      %s34 = scalar_select %p31, %s33, %s24
      %p35 = scmp.ge.s32.totalorder %s34, 2
      %s36 = scalar_select %p35, 0, %s34
      %s37 = sadd.s32 %s24, %s25
      %p38 = scmp.lt.s32.totalorder %s37, 0
      %s39 = scalar_select %p38, %s37, 0
      %s40 = sadd.s32 %s36, %s32
      %p41 = scmp.lt.s32.totalorder %s40, 0
      %s42 = scalar_select %p41, %s40, 0
      %s43 = ssub.s32 %s39, %s42
      %p44 = scmp.eq.s32.totalorder %s43, 0
      %s46 = sadd.s32 %s45, 1
      %s47 = scalar_select %p44, %s45, %s46
      %p50 = pneg %p44
      %p51 = scmp.eq.s32.totalorder %s17, 1
      %p52 = por %p50, %p51
      %p53 = scmp.ne.s32.totalorder %s45, %s48
      %p54 = scmp.eq.s32.totalorder %s17, 0
      %p55 = por %p53, %p54
      %p56 = scmp.ne.s32.totalorder %s45, %s48
      %p57 = scmp.eq.s32.totalorder %s22, 1
      %p58 = por %p56, %p57
      %p59 = scmp.ne.s32.totalorder %s48, %s49
      %p60 = scmp.eq.s32.totalorder %s22, 0
      %p61 = por %p59, %p60
      %p62 = scmp.ne.s32.totalorder %s48, %s49
      %p63 = scmp.eq.s32.totalorder %s23, 1
      %p64 = por %p62, %p63
      %p66 = scmp.ne.s32.totalorder %s49, %s65
      %p67 = scmp.eq.s32.totalorder %s23, 0
      %p68 = por %p66, %p67
      %s69 = sadd.s32 %s24, %s25
      %p70 = scmp.lt.s32.totalorder %s69, 0
      %s71 = scalar_select %p70, %s69, 0
      %s72 = sadd.s32 %s36, %s32
      %p73 = scmp.lt.s32.totalorder %s72, 0
      %s74 = scalar_select %p73, %s72, 0
      %s75 = ssub.s32 %s71, %s74
      %p76 = scmp.eq.s32.totalorder %s75, 0
      %s78 = sadd.s32 %s77, 1
      %s79 = scalar_select %p76, %s77, %s78
      %p82 = pneg %p76
      %p83 = scmp.eq.s32.totalorder %s17, 1
      %p84 = por %p82, %p83
      %p85 = scmp.ne.s32.totalorder %s77, %s80
      %p86 = scmp.eq.s32.totalorder %s17, 0
      %p87 = por %p85, %p86
      %p88 = scmp.ne.s32.totalorder %s77, %s80
      %p89 = scmp.eq.s32.totalorder %s22, 1
      %p90 = por %p88, %p89
      %p91 = scmp.ne.s32.totalorder %s80, %s81
      %p92 = scmp.eq.s32.totalorder %s22, 0
      %p93 = por %p91, %p92
      %p94 = scmp.ne.s32.totalorder %s80, %s81
      %p95 = scmp.eq.s32.totalorder %s23, 1
      %p96 = por %p94, %p95
      %p98 = scmp.ne.s32.totalorder %s81, %s97
      %p99 = scmp.eq.s32.totalorder %s23, 0
      %p100 = por %p98, %p99
      %s101 = ssub.s32 %s24, %s36
      %p102 = scmp.eq.s32.totalorder %s101, 0
      %s104 = sadd.s32 %s103, 1
      %s105 = scalar_select %p102, %s103, %s104
      %p108 = pneg %p102
      %p109 = scmp.eq.s32.totalorder %s17, 1
      %p110 = por %p108, %p109
      %p111 = scmp.ne.s32.totalorder %s103, %s106
      %p112 = scmp.eq.s32.totalorder %s17, 0
      %p113 = por %p111, %p112
      %p114 = scmp.ne.s32.totalorder %s103, %s106
      %p115 = scmp.eq.s32.totalorder %s22, 1
      %p116 = por %p114, %p115
      %p117 = scmp.ne.s32.totalorder %s106, %s107
      %p118 = scmp.eq.s32.totalorder %s22, 0
      %p119 = por %p117, %p118
      %p120 = scmp.ne.s32.totalorder %s106, %s107
      %p121 = scmp.eq.s32.totalorder %s23, 1
      %p122 = por %p120, %p121
      %p124 = scmp.ne.s32.totalorder %s107, %s123
      %p125 = scmp.eq.s32.totalorder %s23, 0
      %p126 = por %p124, %p125
      %p127 = scmp.le.s32.totalorder 1, %s17
      %p128 = scmp.lt.s32.totalorder %s17, 3
      %p129 = pnand %p127, %p128
      %p130 = pneg %p129
      // Predicated region
      $region9: #{tpu_custom_call.1} parent=5 // pred_check
        _
      $region10: #{tpu_custom_call.1} parent=5 // pred_check_branch
        %132 = sbr.rel (%p129) target = $region12
      $region11: #{tpu_custom_call.1} parent=5 // pred_region
        %s133 = ssub.s32 %s17, 1
      $region12: #{tpu_custom_call.1} parent=5 // pred_fallthru
        _
      %p134 = scmp.lt.s32.totalorder %s17, 2
      // Predicated region
      $region13: #{tpu_custom_call.1} parent=5 // pred_check
        %p135 = pneg %p134
      $region14: #{tpu_custom_call.1} parent=5 // pred_check_branch
        %137 = sbr.rel (%p135) target = $region16
      $region15: #{tpu_custom_call.1} parent=5 // pred_region
        // Predicated region
        $region17: #{tpu_custom_call.1} parent=15 // pred_check
          %p138 = pneg %p55
        $region18: #{tpu_custom_call.1} parent=15 // pred_check_branch
          %140 = sbr.rel (%p138) target = $region20
        $region19: #{tpu_custom_call.1} parent=15 // pred_region
          %s141 = sand.u32 %s45, 1
          %s142 = scalar_lea.sflag [#allocation3], %s141
          %s143 = sand.u32 %s45, 1
          %s144 = smul.addr %s143, 16
          %s145 = scalar_lea.vmem [#allocation2], %s144
          %s146 = sadd.s32 %s24, %s25
          %p147 = scmp.lt.s32.totalorder %s146, 0
          %s148 = scalar_select %p147, %s146, 0
          %s149 = smul.u32 2, %s148
          %s151 = ssub.s32 256, 256
          %152 = vsyncadd %s142, %s151
          %s153 = smul.addr %s149, 128
          %s154 = scalar_lea.hbm %s0, %s153
          %s155 = sshll.u32 %s145, 4
          %s156 = int_to_ptr.vmem [resolvable:$true] %s155
          %161 = dma.hbm_to_vmem [thread:$0]  %s154, 256, %s156, %s142, 128, 128, 8
        $region20: #{tpu_custom_call.1} parent=15 // pred_fallthru
          _
        // Predicated region
        $region21: #{tpu_custom_call.1} parent=15 // pred_check
          %p162 = pneg %p87
        $region22: #{tpu_custom_call.1} parent=15 // pred_check_branch
          %164 = sbr.rel (%p162) target = $region24
        $region23: #{tpu_custom_call.1} parent=15 // pred_region
          %s165 = sand.u32 %s77, 1
          %s166 = scalar_lea.sflag [#allocation6], %s165
          %s167 = sand.u32 %s77, 1
          %s168 = smul.addr %s167, 16
          %s169 = scalar_lea.vmem [#allocation5], %s168
          %s170 = sadd.s32 %s24, %s25
          %p171 = scmp.lt.s32.totalorder %s170, 0
          %s172 = scalar_select %p171, %s170, 0
          %s173 = smul.u32 2, %s172
          %s175 = ssub.s32 256, 256
          %176 = vsyncadd %s166, %s175
          %s177 = smul.addr %s173, 128
          %s178 = scalar_lea.hbm %s1, %s177
          %s179 = sshll.u32 %s169, 4
          %s180 = int_to_ptr.vmem [resolvable:$true] %s179
          %185 = dma.hbm_to_vmem [thread:$0]  %s178, 256, %s180, %s166, 128, 128, 8
        $region24: #{tpu_custom_call.1} parent=15 // pred_fallthru
          _
      $region16: #{tpu_custom_call.1} parent=5 // pred_fallthru
        _
      %p186 = scmp.le.s32.totalorder 1, %s17
      %p187 = scmp.lt.s32.totalorder %s17, 3
      %p188 = pnand %p186, %p187
      %p189 = pneg %p188
      // Predicated region
      $region25: #{tpu_custom_call.1} parent=5 // pred_check
        _
      $region26: #{tpu_custom_call.1} parent=5 // pred_check_branch
        %191 = sbr.rel (%p188) target = $region28
      $region27: #{tpu_custom_call.1} parent=5 // pred_region
        %s192 = ssub.s32 %s17, 1
        %s193 = sand.u32 %s48, 1
        %s194 = scalar_lea.sflag [#allocation3], %s193
        %s195 = sand.u32 %s48, 1
        %s196 = smul.addr %s195, 16
        %s197 = scalar_lea.vmem [#allocation2], %s196
        // Predicated region
        $region29: #{tpu_custom_call.1} parent=27 // pred_check
          %p198 = pneg %p61
        $region30: #{tpu_custom_call.1} parent=27 // pred_check_branch
          %200 = sbr.rel (%p198) target = $region32
        $region31: #{tpu_custom_call.1} parent=27 // pred_region
          %201 = dma.done %s194, 256
        $region32: #{tpu_custom_call.1} parent=27 // pred_fallthru
          _
        %s202 = sand.u32 %s80, 1
        %s203 = scalar_lea.sflag [#allocation6], %s202
        %s204 = sand.u32 %s80, 1
        %s205 = smul.addr %s204, 16
        %s206 = scalar_lea.vmem [#allocation5], %s205
        // Predicated region
        $region33: #{tpu_custom_call.1} parent=27 // pred_check
          %p207 = pneg %p93
        $region34: #{tpu_custom_call.1} parent=27 // pred_check_branch
          %209 = sbr.rel (%p207) target = $region36
        $region35: #{tpu_custom_call.1} parent=27 // pred_region
          %210 = dma.done %s203, 256
        $region36: #{tpu_custom_call.1} parent=27 // pred_fallthru
          _
        %s211 = sand.u32 %s48, 1
        %s212 = scalar_lea.sflag [#allocation3], %s211
        %s213 = sand.u32 %s48, 1
        %s214 = smul.addr %s213, 16
        %s215 = scalar_lea.vmem [#allocation2], %s214
        %p216 = pneg %p61
        %p217 = pneg %p58
        %s218 = sand.u32 %s80, 1
        %s219 = scalar_lea.sflag [#allocation6], %s218
        %s220 = sand.u32 %s80, 1
        %s221 = smul.addr %s220, 16
        %s222 = scalar_lea.vmem [#allocation5], %s221
        %p223 = pneg %p93
        %p224 = pneg %p90
        %p225 = pneg %p119
        %p226 = pneg %p116
        %s227 = sand.u32 %s106, 1
        %s228 = scalar_lea.sflag [#allocation4], %s227
        %s229 = sand.u32 %s106, 1
        %s230 = smul.addr %s229, 16
        %s231 = scalar_lea.vmem [#allocation7], %s230
        %s232 = sadd.s32 %s26, %s27
        %p233 = scmp.lt.s32.totalorder %s232, 0
        %s234 = scalar_select %p233, %s232, 0
        %s235 = smul.u32 2, %s234
        %s236 = sadd.s32 %s26, %s27
        %p237 = scmp.lt.s32.totalorder %s236, 0
        %s238 = scalar_select %p237, %s236, 0
        %s239 = smul.u32 2, %s238
        %p240 = scmp.eq.s32.totalorder %s27, 0
        // Predicated region
        $region37: #{tpu_custom_call.1} parent=27 // pred_check
          %p241 = pneg %p240
        $region38: #{tpu_custom_call.1} parent=27 // pred_check_branch
          %243 = sbr.rel (%p241) target = $region40
        $region39: #{tpu_custom_call.1} parent=27 // pred_region
          %244 = vst [vmem:[%s231] sm:$0xff] 0.0
          %245 = vst [vmem:[%s231 + $0x8] sm:$0xff] 0.0
        $region40: #{tpu_custom_call.1} parent=27 // pred_fallthru
          _
        %s246 = sadd.s32 %s26, %s27
        %p247 = scmp.lt.s32.totalorder %s246, 1
        // Predicated region
        $region41: #{tpu_custom_call.1} parent=27 // pred_check
          %p248 = pneg %p247
        $region42: #{tpu_custom_call.1} parent=27 // pred_check_branch
          %250 = sbr.rel (%p248) target = $region44
        $region43: #{tpu_custom_call.1} parent=27 // pred_region
          %v251 = vld [vmem:[%s197] sm:$0xff]
          %v252 = vld [vmem:[%s197 + $0x8] sm:$0xff]
          %v253 = vld [vmem:[%s206] sm:$0xff]
          %v254 = vld [vmem:[%s206 + $0x8] sm:$0xff]
          %v255 = vsub.f32 %v251, %v253
          %v256 = vsub.f32 %v252, %v254
          %v257 = vand.u32 2147483647, %v255
          %v258 = vand.u32 2147483647, %v256
          %v259 = vadd.f32 %v257, 1.0
          %v260 = vadd.f32 %v258, 1.0
          %v261 = vmul.f32 %v259, %v259
          %v262 = vmul.f32 %v260, %v260
          %v263 = vmul.f32 %v255, %v255
          %v264 = vmul.f32 %v256, %v256
          %v265 = vadd.f32 %v263, %v264
          %v266 = vadd.f32 %v261, %v262
          %v267 = vld [vmem:[%s231] sm:$0xff]
          %v268 = vadd.f32 %v267, %v265
          %269 = vst [vmem:[%s231] sm:$0xff] %v268
          %s270 = scalar_lea.vmem %s231, 8 [#allocation7]
          %v271 = vld [vmem:[%s270] sm:$0xff]
          %v272 = vadd.f32 %v271, %v266
          %273 = vst [vmem:[%s270] sm:$0xff] %v272
        $region44: #{tpu_custom_call.1} parent=27 // pred_fallthru
          _
        %s274 = sand.u32 %s106, 1
        %s275 = scalar_lea.sflag [#allocation4], %s274
        %s276 = sand.u32 %s106, 1
        %s277 = smul.addr %s276, 16
        %s278 = scalar_lea.vmem [#allocation7], %s277
        // Predicated region
        $region45: #{tpu_custom_call.1} parent=27 // pred_check
          %p279 = pneg %p116
        $region46: #{tpu_custom_call.1} parent=27 // pred_check_branch
          %281 = sbr.rel (%p279) target = $region48
        $region47: #{tpu_custom_call.1} parent=27 // pred_region
          %s283 = ssub.s32 256, 256
          %284 = vsyncadd %s275, %s283
          %s285 = smul.addr %s26, 2
          %s286 = smul.addr %s285, 128
          %s287 = scalar_lea.hbm %s2, %s286
          %s288 = sshll.u32 %s278, 4
          %s289 = int_to_ptr.vmem [resolvable:$true] %s288
          %294 = dma.vmem_to_hbm [thread:$0]  %s289, 256, %s287, %s275, 128, 128, 8
        $region48: #{tpu_custom_call.1} parent=27 // pred_fallthru
          _
      $region28: #{tpu_custom_call.1} parent=5 // pred_fallthru
        _
      %p295 = scmp.le.s32.totalorder 2, %s17
      // Predicated region
      $region49: #{tpu_custom_call.1} parent=5 // pred_check
        %p296 = pneg %p295
      $region50: #{tpu_custom_call.1} parent=5 // pred_check_branch
        %298 = sbr.rel (%p296) target = $region52
      $region51: #{tpu_custom_call.1} parent=5 // pred_region
        %s299 = ssub.s32 %s17, 2
        // Predicated region
        $region53: #{tpu_custom_call.1} parent=51 // pred_check
          %p300 = pneg %p122
        $region54: #{tpu_custom_call.1} parent=51 // pred_check_branch
          %302 = sbr.rel (%p300) target = $region56
        $region55: #{tpu_custom_call.1} parent=51 // pred_region
          %s303 = sand.u32 %s107, 1
          %s304 = scalar_lea.sflag [#allocation4], %s303
          %s305 = sand.u32 %s107, 1
          %s306 = smul.addr %s305, 16
          %s307 = scalar_lea.vmem [#allocation7], %s306
          %308 = dma.done %s304, 256
        $region56: #{tpu_custom_call.1} parent=51 // pred_fallthru
          _
      $region52: #{tpu_custom_call.1} parent=5 // pred_fallthru
        _
    $region6: #{tpu_custom_call.1} parent=1 // loop_footer
      %s21 = sadd.s32 1, %s17
    $region7: #{tpu_custom_call.1} parent=1 // loop_footer_branch
      %16 = sbr.rel target = $region3
    $region8: #{tpu_custom_call.1} parent=1 // loop_exit
      _
    %309 = vsyncpa [#allocation3], 1
    %s310 = scalar_lea.sflag [#allocation3], 1
    %311 = vsyncpa %s310, 1
    %312 = vsyncpa [#allocation6], 1
    %s313 = scalar_lea.sflag [#allocation6], 1
    %314 = vsyncpa %s313, 1
    %315 = vsyncpa [#allocation4], 1
    %s316 = scalar_lea.sflag [#allocation4], 1
    %317 = vsyncpa %s316, 1

</llo_original>
